<compile_context>
chip_gen: v5e
topology: v5e:2x2
jax: 0.10.0
libtpu: 0.0.40
codegen_flags: <defaults>
</compile_context>

<pallas_src>
import functools

import jax
import jax.numpy as jnp
from jax import lax
from jax.experimental import pallas as pl
from jax.experimental.pallas import tpu as pltpu


def _round_up(x, m):
    return (x + m - 1) // m * m


def _auto_bt(B, Qp, Dp, max_lanes=8192):
    """Largest divisor of B with L <= max_lanes lanes and (if possible) >= 2
    grid steps, so both v7x TensorCores stay busy on the 'parallel' axis."""
    best = 1
    for bt in range(1, B + 1):
        if B % bt:
            continue
        if bt * Qp * Dp > max_lanes:
            break
        if B >= 2 and B // bt < 2:
            continue
        best = bt
    return best


def _vmem_limit_bytes(C, F, S, L, Lin, out_lanes):
    """Scoped-VMEM request: double-buffered input block + in-kernel stacked
    operand / accumulator / epilogue temps, clamped to stay v7x-safe."""
    item = 4  # f32
    est = (2 * C * Lin * item            # double-buffered input block
           + S * S * C * L * item        # stacked im2col operand
           + 2 * F * L * item            # matmul accumulator + epilogue temps
           + 2 * out_lanes * item        # double-buffered output block
           + (1 << 20))                  # weights/bias/misc headroom
    return int(min(48 * 1024 * 1024, max(32 * 1024 * 1024, 2 * est)))


def _pacrr_kernel(x_ref, w_ref, b_ref, o_ref, *, S, Q, D, Qp, Dp, k, bt, kpad):
    # x_ref: (1, C, Lin) f32   w_ref: (F, S*S*C) f32   b_ref: (F, 1) f32
    # o_ref: (1, bt*Q, kpad) f32
    C = x_ref.shape[1]
    L = bt * Qp * Dp                      # full zero-padded flattened plane
    Dk = max(D, k)

    # ---- in-kernel im2col: stack the S*S shifted (C, L) lane-slices along
    # sublanes.  Dp % 128 == 0, so the only lane rotation per shift is j < S.
    pieces = []
    for i in range(S):
        for j in range(S):
            off = i * Dp + j
            pieces.append(x_ref[0, :, off:off + L])            # (C, L)
    xs = pieces[0] if len(pieces) == 1 else jnp.concatenate(pieces, axis=0)

    # ---- ONE fused MXU matmul: (F, S*S*C) @ (S*S*C, L), f32 accumulation.
    acc = jnp.dot(w_ref[...], xs,
                  preferred_element_type=jnp.float32)          # (F, L)

    # ---- bias + max over filters, then ReLU (monotone => order swap exact):
    # the elementwise max-with-0 now runs on (1, L) instead of (F, L).
    tfflat = jnp.maximum(
        jnp.max(acc + b_ref[...], axis=0, keepdims=True), 0.0)  # (1, L)

    # ---- gather the valid (b, q) windows.  Every window start (b*Qp+q)*Dp is
    # a multiple of 128, so each slice is a tile-aligned select (no rotates).
    # TODO(synk): at much larger Q fold this into a single (1, L)->(bt*Qp, Dp)
    # reshape instead of an unrolled concat.
    rows = [tfflat[:, (b * Qp + q) * Dp:(b * Qp + q) * Dp + Dk]
            for b in range(bt) for q in range(Q)]
    tf = rows[0] if len(rows) == 1 else jnp.concatenate(rows, axis=0)  # (bt*Q, Dk)

    iota = lax.broadcasted_iota(jnp.int32, (bt * Q, Dk), 1)
    if D < k:
        # Zero the padded tail columns (matches F.pad in the PyTorch module).
        tf = jnp.where(iota < D, tf, 0.0)

    # ---- top-k via iterative max extraction.  Values are >= 0 (post-ReLU /
    # zero padding), so -1.0 is a safe "removed" sentinel; first-argmax removal
    # matches torch.topk's sorted-descending value semantics.
    vals = tf
    tops = []
    for _ in range(k):
        m = jnp.max(vals, axis=1, keepdims=True)               # (bt*Q, 1)
        tops.append(m)
        first = jnp.min(jnp.where(vals == m, iota, Dk), axis=1, keepdims=True)
        vals = jnp.where(iota == first, jnp.float32(-1.0), vals)
    topk = jnp.concatenate(tops, axis=1)                       # (bt*Q, k)

    # ---- lane-dense, unmasked store: full kpad(=128)-lane rows; the wrapper
    # slices the first k lanes back out.
    if kpad > k:
        topk = jnp.concatenate(
            [topk, jnp.zeros((bt * Q, kpad - k), jnp.float32)], axis=1)
    o_ref[0] = topk


def pacrr_conv_max_2d(simmat, weight, bias, *, shape, k, bt=None):
    """simmat: (B, C, Q, D) NCHW f32; weight: (F, C, S, S); bias: (F,).

    `bt` = batch items folded into the lane axis per grid step (B % bt == 0);
    bt=None auto-selects (fatter steps, but keeps >= 2 grid steps for v7x).
    """
    B, C, Q, D = simmat.shape
    F = weight.shape[0]
    S = shape
    Qp = Q + S - 1                               # rows incl. bottom pad (S-1)
    Dp = _round_up(max(D + S - 1, k), 128)       # per-row lane stride, 128-aligned
    if bt is None:
        bt = _auto_bt(B, Qp, Dp)
    assert B % bt == 0, (B, bt)
    G = B // bt
    L = bt * Qp * Dp
    halo = 0 if S == 1 else (S - 1) * Dp + 128   # zero halo so shifted slices stay in-bounds
    Lin = L + halo
    kpad = _round_up(k, 128)

    # Invariants: every shifted slice and every read conv window stays inside
    # the per-step block (windows never cross batch items / read the halo data).
    assert (S - 1) * Dp + (S - 1) + L <= Lin
    assert (bt - 1) * Qp * Dp + (Q - 1) * Dp + (D - 1) + (S - 1) * Dp + (S - 1) < L

    # --- wrapper glue (plain JAX, ~input-sized; Dp-padding costs ~(128/Dp_raw)x
    # HBM which is acceptable since the kernel is overhead-bound, not DMA-bound).
    x = simmat.astype(jnp.float32)
    padded = jnp.pad(x, ((0, 0), (0, 0), (0, Qp - Q), (0, Dp - D)))
    xf = (padded.reshape(G, bt, C, Qp, Dp)
                .transpose(0, 2, 1, 3, 4)
                .reshape(G, C, L))
    xf = jnp.pad(xf, ((0, 0), (0, 0), (0, halo)))
    # Weights flattened to (F, S*S*C), matching the kernel's (i, j, c) stacking.
    w2 = weight.astype(jnp.float32).transpose(0, 2, 3, 1).reshape(F, S * S * C)
    b2 = bias.astype(jnp.float32).reshape(F, 1)

    kern = functools.partial(_pacrr_kernel, S=S, Q=Q, D=D, Qp=Qp, Dp=Dp,
                             k=k, bt=bt, kpad=kpad)
    flops = 2 * F * S * S * C * L * G
    bytes_accessed = int((xf.size + w2.size + b2.size + G * bt * Q * kpad) * 4)

    out = pl.pallas_call(
        kern,
        out_shape=jax.ShapeDtypeStruct((G, bt * Q, kpad), jnp.float32),
        grid=(G,),
        in_specs=[
            pl.BlockSpec((1, C, Lin), lambda g: (g, 0, 0)),
            pl.BlockSpec((F, S * S * C), lambda g: (0, 0)),   # resident weights
            pl.BlockSpec((F, 1), lambda g: (0, 0)),           # resident bias
        ],
        out_specs=pl.BlockSpec((1, bt * Q, kpad), lambda g: (g, 0, 0)),
        compiler_params=pltpu.CompilerParams(
            dimension_semantics=("parallel",),
            vmem_limit_bytes=_vmem_limit_bytes(C, F, S, L, Lin, bt * Q * kpad)),
        cost_estimate=pl.CostEstimate(flops=flops, transcendentals=0,
                                      bytes_accessed=bytes_accessed),
    )(xf, w2, b2)
    return out[:, :, :k].reshape(B, Q, k)


def _reference(simmat, weight, bias, *, shape, k):
    # Pure-JAX reference mirroring the PyTorch forward exactly.
    B, C, Q, D = simmat.shape
    S = shape
    padded = jnp.pad(simmat, ((0, 0), (0, 0), (0, S - 1), (0, S - 1)))
    conv = lax.conv_general_dilated(
        padded, weight, window_strides=(1, 1), padding="VALID",
        dimension_numbers=("NCHW", "OIHW", "NCHW"))
    conv = jnp.maximum(conv + bias[None, :, None, None], 0.0)
    tf = jnp.max(conv, axis=1)                                  # (B, Q, D)
    if D < k:
        tf = jnp.pad(tf, ((0, 0), (0, 0), (0, k - D)))
    top, _ = lax.top_k(tf, k)
    return top.reshape(B, Q, k)


if __name__ == "__main__":
    # Module hyper-params (small, consistent with the forward pass).
    SHAPE = 3        # conv kernel size
    N_FILTERS = 8
    K = 4
    CHANNELS = 4
    # Input simmat: (BATCH, CHANNELS, QLEN, DLEN)
    B, Q, D = 2, 8, 16

    key = jax.random.PRNGKey(0)
    k_x, k_w, k_b = jax.random.split(key, 3)
    simmat = jax.random.normal(k_x, (B, CHANNELS, Q, D), dtype=jnp.float32)
    weight = 0.1 * jax.random.normal(
        k_w, (N_FILTERS, CHANNELS, SHAPE, SHAPE), dtype=jnp.float32)
    bias = 0.1 * jax.random.normal(k_b, (N_FILTERS,), dtype=jnp.float32)

    ref = _reference(simmat, weight, bias, shape=SHAPE, k=K)

    # Auto bt: picks bt=1 here so G=2 grid steps (keeps both v7x TCs busy).
    out_auto = pacrr_conv_max_2d(simmat, weight, bias, shape=SHAPE, k=K)
    out_auto = jax.block_until_ready(out_auto)
    # bt=2: both batch items folded into the lane axis of a single grid step.
    out_bt2 = pacrr_conv_max_2d(simmat, weight, bias, shape=SHAPE, k=K, bt=2)
    out_bt2 = jax.block_until_ready(out_bt2)

    assert out_auto.shape == (B, Q, K), out_auto.shape
    assert out_bt2.shape == (B, Q, K), out_bt2.shape
    # Tolerance covers MXU pass-precision differences between the in-kernel
    # f32 matmul and XLA's conv (operands are no longer pre-cast to bf16).
    err1 = float(jnp.max(jnp.abs(out_auto - ref)))
    err2 = float(jnp.max(jnp.abs(out_bt2 - ref)))
    assert jnp.allclose(out_auto, ref, atol=1e-2, rtol=1e-2), (
        f"auto-bt mismatch vs reference: max abs err {err1}")
    assert jnp.allclose(out_bt2, ref, atol=1e-2, rtol=1e-2), (
        f"bt=2 mismatch vs reference: max abs err {err2}")
    print("KERNEL_OK")
</pallas_src>

<mosaic_0001>
module attributes {stable_mosaic.version = 11 : i64} {
  func.func @_pacrr_kernel(%arg0: i32, %arg1: memref<1x4x1664xf32, #tpu.memory_space<vmem>>, %arg2: memref<8x36xf32, #tpu.memory_space<vmem>>, %arg3: memref<8x1xf32, #tpu.memory_space<vmem>>, %arg4: memref<1x8x128xf32, #tpu.memory_space<vmem>>) attributes {dimension_semantics = [#tpu.dimension_semantics<parallel>], iteration_bounds = array<i64: 2>, scalar_prefetch = 0 : i64, scratch_operands = 0 : i64, tpu.core_type = #tpu.core_type<tc>, window_params = [{transform_indices = @transform_0, window_bounds = array<i64: 1, 4, 1664>}, {pipeline_mode = #tpu.pipeline_mode<synchronous>, transform_indices = @transform_1, window_bounds = array<i64: 8, 36>}, {pipeline_mode = #tpu.pipeline_mode<synchronous>, transform_indices = @transform_2, window_bounds = array<i64: 8, 1>}, {transform_indices = @transform_3, window_bounds = array<i64: 1, 8, 128>}]} {
    %c0 = arith.constant 0 : index
    %c0_0 = arith.constant 0 : index
    %c0_1 = arith.constant 0 : index
    %0 = vector.load %arg1[%c0, %c0_0, %c0_1] : memref<1x4x1664xf32, #tpu.memory_space<vmem>>, vector<1x4x1280xf32>
    %1 = vector.shape_cast %0 : vector<1x4x1280xf32> to vector<4x1280xf32>
    %c0_2 = arith.constant 0 : index
    %c0_3 = arith.constant 0 : index
    %c1 = arith.constant 1 : index
    %2 = vector.load %arg1[%c0_2, %c0_3, %c1] : memref<1x4x1664xf32, #tpu.memory_space<vmem>>, vector<1x4x1280xf32>
    %3 = vector.shape_cast %2 : vector<1x4x1280xf32> to vector<4x1280xf32>
    %c0_4 = arith.constant 0 : index
    %c0_5 = arith.constant 0 : index
    %c2 = arith.constant 2 : index
    %4 = vector.load %arg1[%c0_4, %c0_5, %c2] : memref<1x4x1664xf32, #tpu.memory_space<vmem>>, vector<1x4x1280xf32>
    %5 = vector.shape_cast %4 : vector<1x4x1280xf32> to vector<4x1280xf32>
    %c0_6 = arith.constant 0 : index
    %c0_7 = arith.constant 0 : index
    %c128 = arith.constant 128 : index
    %6 = vector.load %arg1[%c0_6, %c0_7, %c128] : memref<1x4x1664xf32, #tpu.memory_space<vmem>>, vector<1x4x1280xf32>
    %7 = vector.shape_cast %6 : vector<1x4x1280xf32> to vector<4x1280xf32>
    %c0_8 = arith.constant 0 : index
    %c0_9 = arith.constant 0 : index
    %c129 = arith.constant 129 : index
    %8 = vector.load %arg1[%c0_8, %c0_9, %c129] : memref<1x4x1664xf32, #tpu.memory_space<vmem>>, vector<1x4x1280xf32>
    %9 = vector.shape_cast %8 : vector<1x4x1280xf32> to vector<4x1280xf32>
    %c0_10 = arith.constant 0 : index
    %c0_11 = arith.constant 0 : index
    %c130 = arith.constant 130 : index
    %10 = vector.load %arg1[%c0_10, %c0_11, %c130] : memref<1x4x1664xf32, #tpu.memory_space<vmem>>, vector<1x4x1280xf32>
    %11 = vector.shape_cast %10 : vector<1x4x1280xf32> to vector<4x1280xf32>
    %c0_12 = arith.constant 0 : index
    %c0_13 = arith.constant 0 : index
    %c256 = arith.constant 256 : index
    %12 = vector.load %arg1[%c0_12, %c0_13, %c256] : memref<1x4x1664xf32, #tpu.memory_space<vmem>>, vector<1x4x1280xf32>
    %13 = vector.shape_cast %12 : vector<1x4x1280xf32> to vector<4x1280xf32>
    %c0_14 = arith.constant 0 : index
    %c0_15 = arith.constant 0 : index
    %c257 = arith.constant 257 : index
    %14 = vector.load %arg1[%c0_14, %c0_15, %c257] : memref<1x4x1664xf32, #tpu.memory_space<vmem>>, vector<1x4x1280xf32>
    %15 = vector.shape_cast %14 : vector<1x4x1280xf32> to vector<4x1280xf32>
    %c0_16 = arith.constant 0 : index
    %c0_17 = arith.constant 0 : index
    %c258 = arith.constant 258 : index
    %16 = vector.load %arg1[%c0_16, %c0_17, %c258] : memref<1x4x1664xf32, #tpu.memory_space<vmem>>, vector<1x4x1280xf32>
    %17 = vector.shape_cast %16 : vector<1x4x1280xf32> to vector<4x1280xf32>
    %18 = tpu.concatenate %1, %3, %5, %7, %9, %11, %13, %15, %17 in 0 : vector<4x1280xf32>, vector<4x1280xf32>, vector<4x1280xf32>, vector<4x1280xf32>, vector<4x1280xf32>, vector<4x1280xf32>, vector<4x1280xf32>, vector<4x1280xf32>, vector<4x1280xf32> -> vector<36x1280xf32>
    %c0_18 = arith.constant 0 : index
    %c0_19 = arith.constant 0 : index
    %19 = vector.load %arg2[%c0_18, %c0_19] : memref<8x36xf32, #tpu.memory_space<vmem>>, vector<8x36xf32>
    %cst = arith.constant dense<0.000000e+00> : vector<8x1280xf32>
    %20 = tpu.matmul %19, %18, %cst {dimension_numbers = #tpu.dot_dimension_numbers<[1], [0], [0], [1], [0, 0, 1, 1], [], []>} : vector<8x36xf32>, vector<36x1280xf32>, vector<8x1280xf32> -> vector<8x1280xf32>
    %c0_20 = arith.constant 0 : index
    %c0_21 = arith.constant 0 : index
    %21 = vector.load %arg3[%c0_20, %c0_21] : memref<8x1xf32, #tpu.memory_space<vmem>>, vector<8x1xf32>
    %22 = vector.broadcast %21 : vector<8x1xf32> to vector<8x1280xf32>
    %23 = arith.addf %20, %22 : vector<8x1280xf32>
    %cst_22 = arith.constant dense<0xFF800000> : vector<1280xf32>
    %24 = vector.multi_reduction <maximumf>, %23, %cst_22 [0] : vector<8x1280xf32> to vector<1280xf32>
    %25 = vector.shape_cast %24 : vector<1280xf32> to vector<1x1280xf32>
    %cst_23 = arith.constant 0.000000e+00 : f32
    %26 = vector.broadcast %cst_23 : f32 to vector<1x1280xf32>
    %27 = arith.maximumf %25, %26 : vector<1x1280xf32>
    %28 = vector.extract_strided_slice %27 {offsets = [0, 0], sizes = [1, 16], strides = [1, 1]} : vector<1x1280xf32> to vector<1x16xf32>
    %29 = vector.extract_strided_slice %27 {offsets = [0, 128], sizes = [1, 16], strides = [1, 1]} : vector<1x1280xf32> to vector<1x16xf32>
    %30 = vector.extract_strided_slice %27 {offsets = [0, 256], sizes = [1, 16], strides = [1, 1]} : vector<1x1280xf32> to vector<1x16xf32>
    %31 = vector.extract_strided_slice %27 {offsets = [0, 384], sizes = [1, 16], strides = [1, 1]} : vector<1x1280xf32> to vector<1x16xf32>
    %32 = vector.extract_strided_slice %27 {offsets = [0, 512], sizes = [1, 16], strides = [1, 1]} : vector<1x1280xf32> to vector<1x16xf32>
    %33 = vector.extract_strided_slice %27 {offsets = [0, 640], sizes = [1, 16], strides = [1, 1]} : vector<1x1280xf32> to vector<1x16xf32>
    %34 = vector.extract_strided_slice %27 {offsets = [0, 768], sizes = [1, 16], strides = [1, 1]} : vector<1x1280xf32> to vector<1x16xf32>
    %35 = vector.extract_strided_slice %27 {offsets = [0, 896], sizes = [1, 16], strides = [1, 1]} : vector<1x1280xf32> to vector<1x16xf32>
    %36 = tpu.concatenate %28, %29, %30, %31, %32, %33, %34, %35 in 0 : vector<1x16xf32>, vector<1x16xf32>, vector<1x16xf32>, vector<1x16xf32>, vector<1x16xf32>, vector<1x16xf32>, vector<1x16xf32>, vector<1x16xf32> -> vector<8x16xf32>
    %37 = tpu.iota {dimensions = array<i32: 1>} : vector<8x16xi32>
    %cst_24 = arith.constant dense<0xFF800000> : vector<8xf32>
    %38 = vector.multi_reduction <maximumf>, %36, %cst_24 [1] : vector<8x16xf32> to vector<8xf32>
    %39 = vector.shape_cast %38 : vector<8xf32> to vector<8x1xf32>
    %40 = vector.broadcast %39 : vector<8x1xf32> to vector<8x16xf32>
    %41 = arith.cmpf oeq, %36, %40 : vector<8x16xf32>
    %c16_i32 = arith.constant 16 : i32
    %42 = vector.broadcast %c16_i32 : i32 to vector<8x16xi32>
    %43 = arith.select %41, %37, %42 : vector<8x16xi1>, vector<8x16xi32>
    %cst_25 = arith.constant dense<2147483647> : vector<8xi32>
    %44 = vector.multi_reduction <minsi>, %43, %cst_25 [1] : vector<8x16xi32> to vector<8xi32>
    %45 = vector.shape_cast %44 : vector<8xi32> to vector<8x1xi32>
    %46 = vector.broadcast %45 : vector<8x1xi32> to vector<8x16xi32>
    %47 = arith.cmpi eq, %37, %46 : vector<8x16xi32>
    %cst_26 = arith.constant -1.000000e+00 : f32
    %48 = vector.broadcast %cst_26 : f32 to vector<8x16xf32>
    %49 = arith.select %47, %48, %36 : vector<8x16xi1>, vector<8x16xf32>
    %cst_27 = arith.constant dense<0xFF800000> : vector<8xf32>
    %50 = vector.multi_reduction <maximumf>, %49, %cst_27 [1] : vector<8x16xf32> to vector<8xf32>
    %51 = vector.shape_cast %50 : vector<8xf32> to vector<8x1xf32>
    %52 = vector.broadcast %51 : vector<8x1xf32> to vector<8x16xf32>
    %53 = arith.cmpf oeq, %49, %52 : vector<8x16xf32>
    %c16_i32_28 = arith.constant 16 : i32
    %54 = vector.broadcast %c16_i32_28 : i32 to vector<8x16xi32>
    %55 = arith.select %53, %37, %54 : vector<8x16xi1>, vector<8x16xi32>
    %cst_29 = arith.constant dense<2147483647> : vector<8xi32>
    %56 = vector.multi_reduction <minsi>, %55, %cst_29 [1] : vector<8x16xi32> to vector<8xi32>
    %57 = vector.shape_cast %56 : vector<8xi32> to vector<8x1xi32>
    %58 = vector.broadcast %57 : vector<8x1xi32> to vector<8x16xi32>
    %59 = arith.cmpi eq, %37, %58 : vector<8x16xi32>
    %cst_30 = arith.constant -1.000000e+00 : f32
    %60 = vector.broadcast %cst_30 : f32 to vector<8x16xf32>
    %61 = arith.select %59, %60, %49 : vector<8x16xi1>, vector<8x16xf32>
    %cst_31 = arith.constant dense<0xFF800000> : vector<8xf32>
    %62 = vector.multi_reduction <maximumf>, %61, %cst_31 [1] : vector<8x16xf32> to vector<8xf32>
    %63 = vector.shape_cast %62 : vector<8xf32> to vector<8x1xf32>
    %64 = vector.broadcast %63 : vector<8x1xf32> to vector<8x16xf32>
    %65 = arith.cmpf oeq, %61, %64 : vector<8x16xf32>
    %c16_i32_32 = arith.constant 16 : i32
    %66 = vector.broadcast %c16_i32_32 : i32 to vector<8x16xi32>
    %67 = arith.select %65, %37, %66 : vector<8x16xi1>, vector<8x16xi32>
    %cst_33 = arith.constant dense<2147483647> : vector<8xi32>
    %68 = vector.multi_reduction <minsi>, %67, %cst_33 [1] : vector<8x16xi32> to vector<8xi32>
    %69 = vector.shape_cast %68 : vector<8xi32> to vector<8x1xi32>
    %70 = vector.broadcast %69 : vector<8x1xi32> to vector<8x16xi32>
    %71 = arith.cmpi eq, %37, %70 : vector<8x16xi32>
    %cst_34 = arith.constant -1.000000e+00 : f32
    %72 = vector.broadcast %cst_34 : f32 to vector<8x16xf32>
    %73 = arith.select %71, %72, %61 : vector<8x16xi1>, vector<8x16xf32>
    %cst_35 = arith.constant dense<0xFF800000> : vector<8xf32>
    %74 = vector.multi_reduction <maximumf>, %73, %cst_35 [1] : vector<8x16xf32> to vector<8xf32>
    %75 = vector.shape_cast %74 : vector<8xf32> to vector<8x1xf32>
    %76 = tpu.concatenate %39, %51, %63, %75 in 1 : vector<8x1xf32>, vector<8x1xf32>, vector<8x1xf32>, vector<8x1xf32> -> vector<8x4xf32>
    %cst_36 = arith.constant 0.000000e+00 : f32
    %77 = vector.broadcast %cst_36 : f32 to vector<8x124xf32>
    %78 = tpu.concatenate %76, %77 in 1 : vector<8x4xf32>, vector<8x124xf32> -> vector<8x128xf32>
    %c0_37 = arith.constant 0 : index
    %c0_38 = arith.constant 0 : index
    %c0_39 = arith.constant 0 : index
    %79 = vector.load %arg4[%c0_37, %c0_38, %c0_39] : memref<1x8x128xf32, #tpu.memory_space<vmem>>, vector<1x8x128xf32>
    %80 = vector.shape_cast %79 : vector<1x8x128xf32> to vector<8x128xf32>
    %81 = vector.shape_cast %78 : vector<8x128xf32> to vector<1x8x128xf32>
    tpu.vector_store %arg4[%c0_37, %c0_38, %c0_39], %81 {strides = array<i32>} : memref<1x8x128xf32, #tpu.memory_space<vmem>>, vector<1x8x128xf32>,
    return
  }
  func.func @transform_0(%arg0: i32) -> (i32, i32, i32) {
    %c0_i32 = arith.constant 0 : i32
    %c0_i32_0 = arith.constant 0 : i32
    %c0_i32_1 = arith.constant 0 : i32
    return %arg0, %c0_i32, %c0_i32_0 : i32, i32, i32
  }
  func.func @transform_1(%arg0: i32) -> (i32, i32) {
    %c0_i32 = arith.constant 0 : i32
    %c0_i32_0 = arith.constant 0 : i32
    %c0_i32_1 = arith.constant 0 : i32
    return %c0_i32, %c0_i32_0 : i32, i32
  }
  func.func @transform_2(%arg0: i32) -> (i32, i32) {
    %c0_i32 = arith.constant 0 : i32
    %c0_i32_0 = arith.constant 0 : i32
    %c0_i32_1 = arith.constant 0 : i32
    return %c0_i32, %c0_i32_0 : i32, i32
  }
  func.func @transform_3(%arg0: i32) -> (i32, i32, i32) {
    %c0_i32 = arith.constant 0 : i32
    %c0_i32_0 = arith.constant 0 : i32
    %c0_i32_1 = arith.constant 0 : i32
    return %arg0, %c0_i32, %c0_i32_0 : i32, i32, i32
  }
}

</mosaic_0001>

<llo_original>
// kernel: tpu_custom_call.1
$region0: #{tpu_custom_call.1}
  #allocation0 [shape = 'u32[]', space=smem, size = 0x4, offset = 0x4, fixed_abs, tag = 'smem constant byte address 0x4 - core index']
  #allocation1 [shape = 'u32[72,128]{1,0:T(1,128)}', space=vmem, size = 0x9000, scoped, tag = 'internal scratch']
  %s0 = inlined_call_operand.hbm [shape: f32[2,4,1664], index: 0, kind: input, shape index: {}]
  %s1 = inlined_call_operand.vmem [shape: f32[8,36], index: 1, kind: input, shape index: {}]
  %s2 = inlined_call_operand.vmem [shape: f32[8,1], index: 2, kind: input, shape index: {}]
  %s3 = inlined_call_operand.hbm [shape: f32[2,8,128], index: 3, kind: output, shape index: {}]
  %s4 = sld [smem:[#allocation0]]
  $region49: #{tpu_custom_call.1} parent=0
    _
  %s6 = ssub.s32 1, %s4
  %s7 = scalar_select 0, %s6, %s4
  $region1: #{tpu_custom_call.1} parent=0
    #allocation2 [shape = 'u8[53248]{0}', space=vmem, size = 0xd000, scoped, tag = 'input window, operand 0']
    #allocation3 [shape = 's32[2]{0}', space=sflag, size = 0x8, scoped, tag = 'scoped memory for tpu_custom_call.1']
    #allocation4 [shape = 's32[2]{0}', space=sflag, size = 0x8, scoped, tag = 'scoped memory for tpu_custom_call.1']
    #allocation5 [shape = 'u8[8192]{0}', space=vmem, size = 0x2000, scoped, tag = 'output window, operand 0']
    %8 = vsyncpa [#allocation3], 0
    %s9 = scalar_lea.sflag [#allocation3], 1
    %10 = vsyncpa %s9, 0
    %11 = vsyncpa [#allocation4], 0
    %s12 = scalar_lea.sflag [#allocation4], 1
    %13 = vsyncpa %s12, 0
    loop: start=0, step=1, limit=4
    $region2: #{tpu_custom_call.1} parent=1 // loop_pre_header
      _
    $region3: #{tpu_custom_call.1} parent=1 // loop_header
      %s15 = sphi 0, %s19
      %p16 = scmp.ge.s32.totalorder %s15, 4
      %s25 = sphi 0, %s27
      %s28 = sphi 0, %s25
      %s29 = sphi 0, %s28
      %s45 = sphi 0, %s29
      %s49 = sphi 0, %s49
      %s51 = sphi 0, %s49
      %s52 = sphi 0, %s51
      %s66 = sphi 0, %s52
      %s70 = sphi 0, %s70
      %s72 = sphi 0, %s70
      %s73 = sphi 0, %s72
      %s87 = sphi 0, %s73
      %s93 = sphi 0, %s95
      %s96 = sphi 0, %s93
      %s97 = sphi 0, %s96
      %s113 = sphi 0, %s97
    $region4: #{tpu_custom_call.1} parent=1 // loop_header_branch
      %18 = sbr.rel (%p16) target = $region8
    $region5: #{tpu_custom_call.1} parent=1 // loop_body
      %s20 = ssub.s32 %s15, 1
      %s21 = ssub.s32 %s15, 2
      %s22 = sadd.s32 %s15, 1
      %s23 = ssub.s32 %s15, %s22
      %p24 = scmp.eq.s32.totalorder %s23, 0
      %s26 = sadd.s32 %s25, 1
      %s27 = scalar_select %p24, %s25, %s26
      %p30 = pneg %p24
      %p31 = scmp.eq.s32.totalorder %s15, 1
      %p32 = por %p30, %p31
      %p33 = scmp.ne.s32.totalorder %s25, %s28
      %p34 = scmp.eq.s32.totalorder %s15, 0
      %p35 = por %p33, %p34
      %p36 = scmp.ne.s32.totalorder %s25, %s28
      %p37 = scmp.eq.s32.totalorder %s20, 1
      %p38 = por %p36, %p37
      %p39 = scmp.ne.s32.totalorder %s28, %s29
      %p40 = scmp.eq.s32.totalorder %s20, 0
      %p41 = por %p39, %p40
      %p42 = scmp.ne.s32.totalorder %s28, %s29
      %p43 = scmp.eq.s32.totalorder %s21, 1
      %p44 = por %p42, %p43
      %p46 = scmp.ne.s32.totalorder %s29, %s45
      %p47 = scmp.eq.s32.totalorder %s21, 0
      %p48 = por %p46, %p47
      %s50 = sadd.s32 %s49, 1
      %p53 = scmp.eq.s32.totalorder %s15, 1
      %p54 = scmp.ne.s32.totalorder %s49, %s51
      %p55 = scmp.eq.s32.totalorder %s15, 0
      %p56 = por %p54, %p55
      %p57 = scmp.ne.s32.totalorder %s49, %s51
      %p58 = scmp.eq.s32.totalorder %s20, 1
      %p59 = por %p57, %p58
      %p60 = scmp.ne.s32.totalorder %s51, %s52
      %p61 = scmp.eq.s32.totalorder %s20, 0
      %p62 = por %p60, %p61
      %p63 = scmp.ne.s32.totalorder %s51, %s52
      %p64 = scmp.eq.s32.totalorder %s21, 1
      %p65 = por %p63, %p64
      %p67 = scmp.ne.s32.totalorder %s52, %s66
      %p68 = scmp.eq.s32.totalorder %s21, 0
      %p69 = por %p67, %p68
      %s71 = sadd.s32 %s70, 1
      %p74 = scmp.eq.s32.totalorder %s15, 1
      %p75 = scmp.ne.s32.totalorder %s70, %s72
      %p76 = scmp.eq.s32.totalorder %s15, 0
      %p77 = por %p75, %p76
      %p78 = scmp.ne.s32.totalorder %s70, %s72
      %p79 = scmp.eq.s32.totalorder %s20, 1
      %p80 = por %p78, %p79
      %p81 = scmp.ne.s32.totalorder %s72, %s73
      %p82 = scmp.eq.s32.totalorder %s20, 0
      %p83 = por %p81, %p82
      %p84 = scmp.ne.s32.totalorder %s72, %s73
      %p85 = scmp.eq.s32.totalorder %s21, 1
      %p86 = por %p84, %p85
      %p88 = scmp.ne.s32.totalorder %s73, %s87
      %p89 = scmp.eq.s32.totalorder %s21, 0
      %p90 = por %p88, %p89
      %s91 = ssub.s32 %s15, %s22
      %p92 = scmp.eq.s32.totalorder %s91, 0
      %s94 = sadd.s32 %s93, 1
      %s95 = scalar_select %p92, %s93, %s94
      %p98 = pneg %p92
      %p99 = scmp.eq.s32.totalorder %s15, 1
      %p100 = por %p98, %p99
      %p101 = scmp.ne.s32.totalorder %s93, %s96
      %p102 = scmp.eq.s32.totalorder %s15, 0
      %p103 = por %p101, %p102
      %p104 = scmp.ne.s32.totalorder %s93, %s96
      %p105 = scmp.eq.s32.totalorder %s20, 1
      %p106 = por %p104, %p105
      %p107 = scmp.ne.s32.totalorder %s96, %s97
      %p108 = scmp.eq.s32.totalorder %s20, 0
      %p109 = por %p107, %p108
      %p110 = scmp.ne.s32.totalorder %s96, %s97
      %p111 = scmp.eq.s32.totalorder %s21, 1
      %p112 = por %p110, %p111
      %p114 = scmp.ne.s32.totalorder %s97, %s113
      %p115 = scmp.eq.s32.totalorder %s21, 0
      %p116 = por %p114, %p115
      %p117 = scmp.le.s32.totalorder 1, %s15
      %p118 = scmp.lt.s32.totalorder %s15, 3
      %p119 = pnand %p117, %p118
      %p120 = pneg %p119
      // Predicated region
      $region9: #{tpu_custom_call.1} parent=5 // pred_check
        _
      $region10: #{tpu_custom_call.1} parent=5 // pred_check_branch
        %122 = sbr.rel (%p119) target = $region12
      $region11: #{tpu_custom_call.1} parent=5 // pred_region
        %s123 = ssub.s32 %s15, 1
        // Predicated region
        $region13: #{tpu_custom_call.1} parent=11 // pred_check
          %p124 = pneg %p62
        $region14: #{tpu_custom_call.1} parent=11 // pred_check_branch
          %126 = sbr.rel (%p124) target = $region16
        $region15: #{tpu_custom_call.1} parent=11 // pred_region
          _
        $region16: #{tpu_custom_call.1} parent=11 // pred_fallthru
          _
        // Predicated region
        $region17: #{tpu_custom_call.1} parent=11 // pred_check
          %p127 = pneg %p83
        $region18: #{tpu_custom_call.1} parent=11 // pred_check_branch
          %129 = sbr.rel (%p127) target = $region20
        $region19: #{tpu_custom_call.1} parent=11 // pred_region
          _
        $region20: #{tpu_custom_call.1} parent=11 // pred_fallthru
          _
      $region12: #{tpu_custom_call.1} parent=5 // pred_fallthru
        _
      %p130 = scmp.lt.s32.totalorder %s15, 2
      // Predicated region
      $region21: #{tpu_custom_call.1} parent=5 // pred_check
        %p131 = pneg %p130
      $region22: #{tpu_custom_call.1} parent=5 // pred_check_branch
        %133 = sbr.rel (%p131) target = $region24
      $region23: #{tpu_custom_call.1} parent=5 // pred_region
        // Predicated region
        $region25: #{tpu_custom_call.1} parent=23 // pred_check
          %p134 = pneg %p35
        $region26: #{tpu_custom_call.1} parent=23 // pred_check_branch
          %136 = sbr.rel (%p134) target = $region28
        $region27: #{tpu_custom_call.1} parent=23 // pred_region
          %s137 = sand.u32 %s25, 1
          %s138 = scalar_lea.sflag [#allocation3], %s137
          %s139 = sand.u32 %s25, 1
          %s140 = smul.addr %s139, 52
          %s141 = scalar_lea.vmem [#allocation2], %s140
          %143 = vsyncadd %s138, 0
          %s144 = smul.addr %s15, 13
          %s145 = smul.addr %s144, 4
          %s146 = scalar_lea.hbm %s0, %s145
          %s148 = sshll.u32 %s146, 4
          %s149 = int_to_ptr.hbm [resolvable:$true] %s148
          %s150 = sshll.u32 %s141, 4
          %s151 = int_to_ptr.vmem [resolvable:$true] %s150
          %153 = dma.hbm_to_vmem [thread:$0]  %s149, 832, %s151, %s138
        $region28: #{tpu_custom_call.1} parent=23 // pred_fallthru
          _
      $region24: #{tpu_custom_call.1} parent=5 // pred_fallthru
        _
      %p154 = scmp.le.s32.totalorder 1, %s15
      %p155 = scmp.lt.s32.totalorder %s15, 3
      %p156 = pnand %p154, %p155
      %p157 = pneg %p156
      // Predicated region
      $region29: #{tpu_custom_call.1} parent=5 // pred_check
        _
      $region30: #{tpu_custom_call.1} parent=5 // pred_check_branch
        %159 = sbr.rel (%p156) target = $region32
      $region31: #{tpu_custom_call.1} parent=5 // pred_region
        %s160 = ssub.s32 %s15, 1
        %s161 = sand.u32 %s28, 1
        %s162 = scalar_lea.sflag [#allocation3], %s161
        %s163 = sand.u32 %s28, 1
        %s164 = smul.addr %s163, 52
        %s165 = scalar_lea.vmem [#allocation2], %s164
        // Predicated region
        $region33: #{tpu_custom_call.1} parent=31 // pred_check
          %p166 = pneg %p41
        $region34: #{tpu_custom_call.1} parent=31 // pred_check_branch
          %168 = sbr.rel (%p166) target = $region36
        $region35: #{tpu_custom_call.1} parent=31 // pred_region
          %170 = dma.done %s162, 832
        $region36: #{tpu_custom_call.1} parent=31 // pred_fallthru
          _
        %s171 = sand.u32 %s28, 1
        %s172 = scalar_lea.sflag [#allocation3], %s171
        %s173 = sand.u32 %s28, 1
        %s174 = smul.addr %s173, 52
        %s175 = scalar_lea.vmem [#allocation2], %s174
        %p176 = pneg %p41
        %p177 = pneg %p38
        %p178 = pneg %p62
        %p179 = pneg %p59
        %p180 = pneg %p83
        %p181 = pneg %p80
        %p182 = pneg %p109
        %p183 = pneg %p106
        %s184 = sand.u32 %s96, 1
        %s185 = scalar_lea.sflag [#allocation4], %s184
        %s186 = sand.u32 %s96, 1
        %s187 = smul.addr %s186, 8
        %s188 = scalar_lea.vmem [#allocation5], %s187
        %v189 = vld [vmem:[%s165] sm:$0xff]
        %v190 = vld [vmem:[%s165 + $0x8] sm:$0xff]
        %v191 = vld [vmem:[%s165 + $0x10] sm:$0xff]
        %v192 = vld [vmem:[%s165 + $0x18] sm:$0xff]
        %v193 = vld [vmem:[%s165 + $0x20] sm:$0xff]
        %v194 = vld [vmem:[%s165 + $0x28] sm:$0xf]
        %v195 = vld [vmem:[%s165 + $0x4] sm:$0xff]
        %v196 = vld [vmem:[%s165 + $0xc] sm:$0xff]
        %v197 = vld [vmem:[%s165 + $0x14] sm:$0xff]
        %v198 = vld [vmem:[%s165 + $0x1c] sm:$0xff]
        %v199 = vld [vmem:[%s165 + $0x24] sm:$0xff]
        %v200 = vld [vmem:[%s165 + $0x2c] sm:$0xf]
        %v201 = vld [vmem:[%s165 + $0x28] sm:$0xff]
        %v202 = vld [vmem:[%s165 + $0x8] sm:$0xff]
        %v203 = vld [vmem:[%s165 + $0x10] sm:$0xff]
        %v204 = vld [vmem:[%s165 + $0x18] sm:$0xff]
        %v205 = vld [vmem:[%s165 + $0x20] sm:$0xff]
        %v206 = vld [vmem:[%s165 + $0x28] sm:$0xff]
        %v207 = vld [vmem:[%s165 + $0x30] sm:$0xf]
        %213 = vst [vmem:[#allocation1] ss:$2 sm:$0xff] %v189
        %s214 = scalar_lea.vmem [#allocation1], 16
        %215 = vst [vmem:[%s214] ss:$2 sm:$0xff] %v190
        %s216 = scalar_lea.vmem [#allocation1], 32
        %217 = vst [vmem:[%s216] ss:$2 sm:$0xff] %v191
        %s218 = scalar_lea.vmem [#allocation1], 48
        %219 = vst [vmem:[%s218] ss:$2 sm:$0xff] %v192
        %v220 = vld.sshfl [vmem:[#allocation1] sm:$0xff pattern:$0x75316420]
        %v221 = vld.sshfl [vmem:[#allocation1 + $0x8] sm:$0xff pattern:$0x75316420]
        %v222 = vld.sshfl [vmem:[#allocation1 + $0x10] sm:$0xff pattern:$0x75316420]
        %v223 = vld.sshfl [vmem:[#allocation1 + $0x18] sm:$0xff pattern:$0x75316420]
        %v224 = vld.sshfl [vmem:[#allocation1 + $0x20] sm:$0xff pattern:$0x75316420]
        %v225 = vld.sshfl [vmem:[#allocation1 + $0x28] sm:$0xff pattern:$0x75316420]
        %v226 = vld.sshfl [vmem:[#allocation1 + $0x30] sm:$0xff pattern:$0x75316420]
        %v227 = vld.sshfl [vmem:[#allocation1 + $0x38] sm:$0xff pattern:$0x75316420]
        %228 = vst [vmem:[#allocation1] ss:$2 sm:$0xff] %v193
        %s238 = scalar_lea.vmem [#allocation1], 1
        %239 = vst [vmem:[%s238] ss:$2 sm:$0xff] %v189
        %s240 = scalar_lea.vmem [#allocation1], 17
        %241 = vst [vmem:[%s240] ss:$2 sm:$0xff] %v190
        %s242 = scalar_lea.vmem [#allocation1], 33
        %243 = vst [vmem:[%s242] ss:$2 sm:$0xff] %v191
        %s244 = scalar_lea.vmem [#allocation1], 49
        %245 = vst [vmem:[%s244] ss:$2 sm:$0xff] %v192
        %v246 = vld.sshfl [vmem:[#allocation1] sm:$0xff pattern:$0x75316420]
        %v247 = vld.sshfl [vmem:[#allocation1 + $0x8] sm:$0xff pattern:$0x75316420]
        %v248 = vld.sshfl [vmem:[#allocation1 + $0x10] sm:$0xff pattern:$0x75316420]
        %v249 = vld.sshfl [vmem:[#allocation1 + $0x18] sm:$0xff pattern:$0x75316420]
        %v250 = vld.sshfl [vmem:[#allocation1 + $0x20] sm:$0xff pattern:$0x75316420]
        %v251 = vld.sshfl [vmem:[#allocation1 + $0x28] sm:$0xff pattern:$0x75316420]
        %v252 = vld.sshfl [vmem:[#allocation1 + $0x30] sm:$0xff pattern:$0x75316420]
        %v253 = vld.sshfl [vmem:[#allocation1 + $0x38] sm:$0xff pattern:$0x75316420]
        %254 = vst [vmem:[%s238] ss:$2 sm:$0xff] %v193
        %255 = vst [vmem:[%s240] ss:$2 sm:$0xff] %v194
        %v256 = vld.sshfl [vmem:[#allocation1] sm:$0xff pattern:$0x75316420]
        %257 = vrot.lane.b32.xlu0 %v246, 127
        %v258 = vpop.permute.xlu0 %257
        %259 = vrot.lane.b32.xlu0 %v247, 127
        %v260 = vpop.permute.xlu0 %259
        %261 = vrot.lane.b32.xlu0 %v248, 127
        %v262 = vpop.permute.xlu0 %261
        %263 = vrot.lane.b32.xlu0 %v249, 127
        %v264 = vpop.permute.xlu0 %263
        %265 = vrot.lane.b32.xlu0 %v250, 127
        %v266 = vpop.permute.xlu0 %265
        %267 = vrot.lane.b32.xlu0 %v251, 127
        %v268 = vpop.permute.xlu0 %267
        %269 = vrot.lane.b32.xlu0 %v252, 127
        %v270 = vpop.permute.xlu0 %269
        %271 = vrot.lane.b32.xlu0 %v253, 127
        %v272 = vpop.permute.xlu0 %271
        %273 = vrot.lane.b32.xlu0 %v256, 127
        %v274 = vpop.permute.xlu0 %273
        %vm275 = vcmask 1039360
        %v276 = vsel %vm275, %v258, %v260
        %v277 = vsel %vm275, %v260, %v262
        %v278 = vsel %vm275, %v262, %v264
        %v279 = vsel %vm275, %v264, %v266
        %v280 = vsel %vm275, %v266, %v268
        %v281 = vsel %vm275, %v268, %v270
        %v282 = vsel %vm275, %v270, %v272
        %v283 = vsel %vm275, %v272, %v274
        %292 = vst [vmem:[#allocation1] ss:$2 sm:$0xff] %v189
        %s293 = scalar_lea.vmem [#allocation1], 16
        %294 = vst [vmem:[%s293] ss:$2 sm:$0xff] %v190
        %s295 = scalar_lea.vmem [#allocation1], 32
        %296 = vst [vmem:[%s295] ss:$2 sm:$0xff] %v191
        %s297 = scalar_lea.vmem [#allocation1], 48
        %298 = vst [vmem:[%s297] ss:$2 sm:$0xff] %v192
        %v299 = vld.sshfl [vmem:[#allocation1] sm:$0xff pattern:$0x75316420]
        %v300 = vld.sshfl [vmem:[#allocation1 + $0x8] sm:$0xff pattern:$0x75316420]
        %v301 = vld.sshfl [vmem:[#allocation1 + $0x10] sm:$0xff pattern:$0x75316420]
        %v302 = vld.sshfl [vmem:[#allocation1 + $0x18] sm:$0xff pattern:$0x75316420]
        %v303 = vld.sshfl [vmem:[#allocation1 + $0x20] sm:$0xff pattern:$0x75316420]
        %v304 = vld.sshfl [vmem:[#allocation1 + $0x28] sm:$0xff pattern:$0x75316420]
        %v305 = vld.sshfl [vmem:[#allocation1 + $0x30] sm:$0xff pattern:$0x75316420]
        %v306 = vld.sshfl [vmem:[#allocation1 + $0x38] sm:$0xff pattern:$0x75316420]
        %307 = vst [vmem:[#allocation1] ss:$2 sm:$0xff] %v193
        %308 = vst [vmem:[%s293] ss:$2 sm:$0xff] %v194
        %v309 = vld.sshfl [vmem:[#allocation1] sm:$0xff pattern:$0x75316420]
        %310 = vrot.lane.b32.xlu0 %v299, 126
        %v311 = vpop.permute.xlu0 %310
        %312 = vrot.lane.b32.xlu0 %v300, 126
        %v313 = vpop.permute.xlu0 %312
        %314 = vrot.lane.b32.xlu0 %v301, 126
        %v315 = vpop.permute.xlu0 %314
        %316 = vrot.lane.b32.xlu0 %v302, 126
        %v317 = vpop.permute.xlu0 %316
        %318 = vrot.lane.b32.xlu0 %v303, 126
        %v319 = vpop.permute.xlu0 %318
        %320 = vrot.lane.b32.xlu0 %v304, 126
        %v321 = vpop.permute.xlu0 %320
        %322 = vrot.lane.b32.xlu0 %v305, 126
        %v323 = vpop.permute.xlu0 %322
        %324 = vrot.lane.b32.xlu0 %v306, 126
        %v325 = vpop.permute.xlu0 %324
        %326 = vrot.lane.b32.xlu0 %v309, 126
        %v327 = vpop.permute.xlu0 %326
        %vm328 = vcmask 1031168
        %v329 = vsel %vm328, %v311, %v313
        %v330 = vsel %vm328, %v313, %v315
        %v331 = vsel %vm328, %v315, %v317
        %v332 = vsel %vm328, %v317, %v319
        %v333 = vsel %vm328, %v319, %v321
        %v334 = vsel %vm328, %v321, %v323
        %v335 = vsel %vm328, %v323, %v325
        %v336 = vsel %vm328, %v325, %v327
        %s350 = scalar_lea.vmem [#allocation1], 1
        %351 = vst [vmem:[%s350] ss:$2 sm:$0xff] %v195
        %s352 = scalar_lea.vmem [#allocation1], 17
        %353 = vst [vmem:[%s352] ss:$2 sm:$0xff] %v196
        %s354 = scalar_lea.vmem [#allocation1], 33
        %355 = vst [vmem:[%s354] ss:$2 sm:$0xff] %v197
        %s356 = scalar_lea.vmem [#allocation1], 49
        %357 = vst [vmem:[%s356] ss:$2 sm:$0xff] %v198
        %v358 = vld.sshfl [vmem:[#allocation1] sm:$0xff pattern:$0x75316420]
        %v359 = vld.sshfl [vmem:[#allocation1 + $0x8] sm:$0xff pattern:$0x75316420]
        %v360 = vld.sshfl [vmem:[#allocation1 + $0x10] sm:$0xff pattern:$0x75316420]
        %v361 = vld.sshfl [vmem:[#allocation1 + $0x18] sm:$0xff pattern:$0x75316420]
        %v362 = vld.sshfl [vmem:[#allocation1 + $0x20] sm:$0xff pattern:$0x75316420]
        %v363 = vld.sshfl [vmem:[#allocation1 + $0x28] sm:$0xff pattern:$0x75316420]
        %v364 = vld.sshfl [vmem:[#allocation1 + $0x30] sm:$0xff pattern:$0x75316420]
        %v365 = vld.sshfl [vmem:[#allocation1 + $0x38] sm:$0xff pattern:$0x75316420]
        %366 = vst [vmem:[%s350] ss:$2 sm:$0xff] %v199
        %376 = vst [vmem:[#allocation1] ss:$2 sm:$0xff] %v195
        %s377 = scalar_lea.vmem [#allocation1], 16
        %378 = vst [vmem:[%s377] ss:$2 sm:$0xff] %v196
        %s379 = scalar_lea.vmem [#allocation1], 32
        %380 = vst [vmem:[%s379] ss:$2 sm:$0xff] %v197
        %s381 = scalar_lea.vmem [#allocation1], 48
        %382 = vst [vmem:[%s381] ss:$2 sm:$0xff] %v198
        %v383 = vld.sshfl [vmem:[#allocation1] sm:$0xff pattern:$0x75316420]
        %v384 = vld.sshfl [vmem:[#allocation1 + $0x8] sm:$0xff pattern:$0x75316420]
        %v385 = vld.sshfl [vmem:[#allocation1 + $0x10] sm:$0xff pattern:$0x75316420]
        %v386 = vld.sshfl [vmem:[#allocation1 + $0x18] sm:$0xff pattern:$0x75316420]
        %v387 = vld.sshfl [vmem:[#allocation1 + $0x20] sm:$0xff pattern:$0x75316420]
        %v388 = vld.sshfl [vmem:[#allocation1 + $0x28] sm:$0xff pattern:$0x75316420]
        %v389 = vld.sshfl [vmem:[#allocation1 + $0x30] sm:$0xff pattern:$0x75316420]
        %v390 = vld.sshfl [vmem:[#allocation1 + $0x38] sm:$0xff pattern:$0x75316420]
        %391 = vst [vmem:[#allocation1] ss:$2 sm:$0xff] %v199
        %392 = vst [vmem:[%s377] ss:$2 sm:$0xff] %v200
        %v393 = vld.sshfl [vmem:[#allocation1] sm:$0xff pattern:$0x75316420]
        %394 = vrot.lane.b32.xlu0 %v383, 127
        %v395 = vpop.permute.xlu0 %394
        %396 = vrot.lane.b32.xlu0 %v384, 127
        %v397 = vpop.permute.xlu0 %396
        %398 = vrot.lane.b32.xlu0 %v385, 127
        %v399 = vpop.permute.xlu0 %398
        %400 = vrot.lane.b32.xlu0 %v386, 127
        %v401 = vpop.permute.xlu0 %400
        %402 = vrot.lane.b32.xlu0 %v387, 127
        %v403 = vpop.permute.xlu0 %402
        %404 = vrot.lane.b32.xlu0 %v388, 127
        %v405 = vpop.permute.xlu0 %404
        %406 = vrot.lane.b32.xlu0 %v389, 127
        %v407 = vpop.permute.xlu0 %406
        %408 = vrot.lane.b32.xlu0 %v390, 127
        %v409 = vpop.permute.xlu0 %408
        %410 = vrot.lane.b32.xlu0 %v393, 127
        %v411 = vpop.permute.xlu0 %410
        %v412 = vsel %vm275, %v395, %v397
        %v413 = vsel %vm275, %v397, %v399
        %v414 = vsel %vm275, %v399, %v401
        %v415 = vsel %vm275, %v401, %v403
        %v416 = vsel %vm275, %v403, %v405
        %v417 = vsel %vm275, %v405, %v407
        %v418 = vsel %vm275, %v407, %v409
        %v419 = vsel %vm275, %v409, %v411
        %s428 = scalar_lea.vmem [#allocation1], 1
        %429 = vst [vmem:[%s428] ss:$2 sm:$0xff] %v195
        %s430 = scalar_lea.vmem [#allocation1], 17
        %431 = vst [vmem:[%s430] ss:$2 sm:$0xff] %v196
        %s432 = scalar_lea.vmem [#allocation1], 33
        %433 = vst [vmem:[%s432] ss:$2 sm:$0xff] %v197
        %s434 = scalar_lea.vmem [#allocation1], 49
        %435 = vst [vmem:[%s434] ss:$2 sm:$0xff] %v198
        %v436 = vld.sshfl [vmem:[#allocation1] sm:$0xff pattern:$0x75316420]
        %v437 = vld.sshfl [vmem:[#allocation1 + $0x8] sm:$0xff pattern:$0x75316420]
        %v438 = vld.sshfl [vmem:[#allocation1 + $0x10] sm:$0xff pattern:$0x75316420]
        %v439 = vld.sshfl [vmem:[#allocation1 + $0x18] sm:$0xff pattern:$0x75316420]
        %v440 = vld.sshfl [vmem:[#allocation1 + $0x20] sm:$0xff pattern:$0x75316420]
        %v441 = vld.sshfl [vmem:[#allocation1 + $0x28] sm:$0xff pattern:$0x75316420]
        %v442 = vld.sshfl [vmem:[#allocation1 + $0x30] sm:$0xff pattern:$0x75316420]
        %v443 = vld.sshfl [vmem:[#allocation1 + $0x38] sm:$0xff pattern:$0x75316420]
        %444 = vst [vmem:[%s428] ss:$2 sm:$0xff] %v199
        %445 = vst [vmem:[%s430] ss:$2 sm:$0xff] %v200
        %v446 = vld.sshfl [vmem:[#allocation1] sm:$0xff pattern:$0x75316420]
        %447 = vrot.lane.b32.xlu0 %v436, 126
        %v448 = vpop.permute.xlu0 %447
        %449 = vrot.lane.b32.xlu0 %v437, 126
        %v450 = vpop.permute.xlu0 %449
        %451 = vrot.lane.b32.xlu0 %v438, 126
        %v452 = vpop.permute.xlu0 %451
        %453 = vrot.lane.b32.xlu0 %v439, 126
        %v454 = vpop.permute.xlu0 %453
        %455 = vrot.lane.b32.xlu0 %v440, 126
        %v456 = vpop.permute.xlu0 %455
        %457 = vrot.lane.b32.xlu0 %v441, 126
        %v458 = vpop.permute.xlu0 %457
        %459 = vrot.lane.b32.xlu0 %v442, 126
        %v460 = vpop.permute.xlu0 %459
        %461 = vrot.lane.b32.xlu0 %v443, 126
        %v462 = vpop.permute.xlu0 %461
        %463 = vrot.lane.b32.xlu0 %v446, 126
        %v464 = vpop.permute.xlu0 %463
        %v465 = vsel %vm328, %v448, %v450
        %v466 = vsel %vm328, %v450, %v452
        %v467 = vsel %vm328, %v452, %v454
        %v468 = vsel %vm328, %v454, %v456
        %v469 = vsel %vm328, %v456, %v458
        %v470 = vsel %vm328, %v458, %v460
        %v471 = vsel %vm328, %v460, %v462
        %v472 = vsel %vm328, %v462, %v464
        %482 = vst [vmem:[#allocation1] ss:$2 sm:$0xff] %v190
        %s483 = scalar_lea.vmem [#allocation1], 16
        %484 = vst [vmem:[%s483] ss:$2 sm:$0xff] %v191
        %s485 = scalar_lea.vmem [#allocation1], 32
        %486 = vst [vmem:[%s485] ss:$2 sm:$0xff] %v192
        %s487 = scalar_lea.vmem [#allocation1], 48
        %488 = vst [vmem:[%s487] ss:$2 sm:$0xff] %v193
        %v489 = vld.sshfl [vmem:[#allocation1] sm:$0xff pattern:$0x75316420]
        %v490 = vld.sshfl [vmem:[#allocation1 + $0x8] sm:$0xff pattern:$0x75316420]
        %v491 = vld.sshfl [vmem:[#allocation1 + $0x10] sm:$0xff pattern:$0x75316420]
        %v492 = vld.sshfl [vmem:[#allocation1 + $0x18] sm:$0xff pattern:$0x75316420]
        %v493 = vld.sshfl [vmem:[#allocation1 + $0x20] sm:$0xff pattern:$0x75316420]
        %v494 = vld.sshfl [vmem:[#allocation1 + $0x28] sm:$0xff pattern:$0x75316420]
        %v495 = vld.sshfl [vmem:[#allocation1 + $0x30] sm:$0xff pattern:$0x75316420]
        %v496 = vld.sshfl [vmem:[#allocation1 + $0x38] sm:$0xff pattern:$0x75316420]
        %497 = vst [vmem:[#allocation1] ss:$2 sm:$0xff] %v201
        %s512 = scalar_lea.vmem [#allocation1], 1
        %513 = vst [vmem:[%s512] ss:$2 sm:$0xff] %v202
        %s514 = scalar_lea.vmem [#allocation1], 17
        %515 = vst [vmem:[%s514] ss:$2 sm:$0xff] %v203
        %s516 = scalar_lea.vmem [#allocation1], 33
        %517 = vst [vmem:[%s516] ss:$2 sm:$0xff] %v204
        %s518 = scalar_lea.vmem [#allocation1], 49
        %519 = vst [vmem:[%s518] ss:$2 sm:$0xff] %v205
        %v520 = vld.sshfl [vmem:[#allocation1] sm:$0xff pattern:$0x75316420]
        %v521 = vld.sshfl [vmem:[#allocation1 + $0x8] sm:$0xff pattern:$0x75316420]
        %v522 = vld.sshfl [vmem:[#allocation1 + $0x10] sm:$0xff pattern:$0x75316420]
        %v523 = vld.sshfl [vmem:[#allocation1 + $0x18] sm:$0xff pattern:$0x75316420]
        %v524 = vld.sshfl [vmem:[#allocation1 + $0x20] sm:$0xff pattern:$0x75316420]
        %v525 = vld.sshfl [vmem:[#allocation1 + $0x28] sm:$0xff pattern:$0x75316420]
        %v526 = vld.sshfl [vmem:[#allocation1 + $0x30] sm:$0xff pattern:$0x75316420]
        %v527 = vld.sshfl [vmem:[#allocation1 + $0x38] sm:$0xff pattern:$0x75316420]
        %528 = vst [vmem:[%s512] ss:$2 sm:$0xff] %v206
        %529 = vst [vmem:[%s514] ss:$2 sm:$0xff] %v207
        %v530 = vld.sshfl [vmem:[#allocation1] sm:$0xff pattern:$0x75316420]
        %531 = vrot.lane.b32.xlu0 %v520, 127
        %v532 = vpop.permute.xlu0 %531
        %533 = vrot.lane.b32.xlu0 %v521, 127
        %v534 = vpop.permute.xlu0 %533
        %535 = vrot.lane.b32.xlu0 %v522, 127
        %v536 = vpop.permute.xlu0 %535
        %537 = vrot.lane.b32.xlu0 %v523, 127
        %v538 = vpop.permute.xlu0 %537
        %539 = vrot.lane.b32.xlu0 %v524, 127
        %v540 = vpop.permute.xlu0 %539
        %541 = vrot.lane.b32.xlu0 %v525, 127
        %v542 = vpop.permute.xlu0 %541
        %543 = vrot.lane.b32.xlu0 %v526, 127
        %v544 = vpop.permute.xlu0 %543
        %545 = vrot.lane.b32.xlu0 %v527, 127
        %v546 = vpop.permute.xlu0 %545
        %547 = vrot.lane.b32.xlu0 %v530, 127
        %v548 = vpop.permute.xlu0 %547
        %v549 = vsel %vm275, %v532, %v534
        %v550 = vsel %vm275, %v534, %v536
        %v551 = vsel %vm275, %v536, %v538
        %v552 = vsel %vm275, %v538, %v540
        %v553 = vsel %vm275, %v540, %v542
        %v554 = vsel %vm275, %v542, %v544
        %v555 = vsel %vm275, %v544, %v546
        %v556 = vsel %vm275, %v546, %v548
        %565 = vst [vmem:[#allocation1] ss:$2 sm:$0xff] %v202
        %s566 = scalar_lea.vmem [#allocation1], 16
        %567 = vst [vmem:[%s566] ss:$2 sm:$0xff] %v203
        %s568 = scalar_lea.vmem [#allocation1], 32
        %569 = vst [vmem:[%s568] ss:$2 sm:$0xff] %v204
        %s570 = scalar_lea.vmem [#allocation1], 48
        %571 = vst [vmem:[%s570] ss:$2 sm:$0xff] %v205
        %v572 = vld.sshfl [vmem:[#allocation1] sm:$0xff pattern:$0x75316420]
        %v573 = vld.sshfl [vmem:[#allocation1 + $0x8] sm:$0xff pattern:$0x75316420]
        %v574 = vld.sshfl [vmem:[#allocation1 + $0x10] sm:$0xff pattern:$0x75316420]
        %v575 = vld.sshfl [vmem:[#allocation1 + $0x18] sm:$0xff pattern:$0x75316420]
        %v576 = vld.sshfl [vmem:[#allocation1 + $0x20] sm:$0xff pattern:$0x75316420]
        %v577 = vld.sshfl [vmem:[#allocation1 + $0x28] sm:$0xff pattern:$0x75316420]
        %v578 = vld.sshfl [vmem:[#allocation1 + $0x30] sm:$0xff pattern:$0x75316420]
        %v579 = vld.sshfl [vmem:[#allocation1 + $0x38] sm:$0xff pattern:$0x75316420]
        %580 = vst [vmem:[#allocation1] ss:$2 sm:$0xff] %v206
        %581 = vst [vmem:[%s566] ss:$2 sm:$0xff] %v207
        %v582 = vld.sshfl [vmem:[#allocation1] sm:$0xff pattern:$0x75316420]
        %583 = vrot.lane.b32.xlu0 %v572, 126
        %v584 = vpop.permute.xlu0 %583
        %585 = vrot.lane.b32.xlu0 %v573, 126
        %v586 = vpop.permute.xlu0 %585
        %587 = vrot.lane.b32.xlu0 %v574, 126
        %v588 = vpop.permute.xlu0 %587
        %589 = vrot.lane.b32.xlu0 %v575, 126
        %v590 = vpop.permute.xlu0 %589
        %591 = vrot.lane.b32.xlu0 %v576, 126
        %v592 = vpop.permute.xlu0 %591
        %593 = vrot.lane.b32.xlu0 %v577, 126
        %v594 = vpop.permute.xlu0 %593
        %595 = vrot.lane.b32.xlu0 %v578, 126
        %v596 = vpop.permute.xlu0 %595
        %597 = vrot.lane.b32.xlu0 %v579, 126
        %v598 = vpop.permute.xlu0 %597
        %599 = vrot.lane.b32.xlu0 %v582, 126
        %v600 = vpop.permute.xlu0 %599
        %v601 = vsel %vm328, %v584, %v586
        %v602 = vsel %vm328, %v586, %v588
        %v603 = vsel %vm328, %v588, %v590
        %v604 = vsel %vm328, %v590, %v592
        %v605 = vsel %vm328, %v592, %v594
        %v606 = vsel %vm328, %v594, %v596
        %v607 = vsel %vm328, %v596, %v598
        %v608 = vsel %vm328, %v598, %v600
        %vm609 = vcmask 1043456
        %v610 = vsel %vm609, %v220, %v276
        %v611 = vsel %vm609, %v221, %v277
        %v612 = vsel %vm609, %v222, %v278
        %v613 = vsel %vm609, %v223, %v279
        %v614 = vsel %vm609, %v224, %v280
        %v615 = vsel %vm609, %v225, %v281
        %v616 = vsel %vm609, %v226, %v282
        %v617 = vsel %vm609, %v227, %v283
        %v618 = vsel %vm609, %v329, %v358
        %v619 = vsel %vm609, %v330, %v359
        %v620 = vsel %vm609, %v331, %v360
        %v621 = vsel %vm609, %v332, %v361
        %v622 = vsel %vm609, %v333, %v362
        %v623 = vsel %vm609, %v334, %v363
        %v624 = vsel %vm609, %v335, %v364
        %v625 = vsel %vm609, %v336, %v365
        %v626 = vsel %vm609, %v412, %v465
        %v627 = vsel %vm609, %v413, %v466
        %v628 = vsel %vm609, %v414, %v467
        %v629 = vsel %vm609, %v415, %v468
        %v630 = vsel %vm609, %v416, %v469
        %v631 = vsel %vm609, %v417, %v470
        %v632 = vsel %vm609, %v418, %v471
        %v633 = vsel %vm609, %v419, %v472
        %v634 = vsel %vm609, %v489, %v549
        %v635 = vsel %vm609, %v490, %v550
        %v636 = vsel %vm609, %v491, %v551
        %v637 = vsel %vm609, %v492, %v552
        %v638 = vsel %vm609, %v493, %v553
        %v639 = vsel %vm609, %v494, %v554
        %v640 = vsel %vm609, %v495, %v555
        %v641 = vsel %vm609, %v496, %v556
        %v642 = vld [vmem:[%s1] sm:$0xff]
        %v643 = vld [vmem:[%s2] sm:$0xff]
        %645 = vset.pattern.permute.xlu0 0
        %646 = vperm.xlu0 %645, %v643
        %v647 = vpop.permute.xlu0 %646
        %vm649 = vcmask 293888
        %v651 = vsel %vm649, %v642, 0
        %v653 = vsel %vm609, %v601, 0
        %v655 = vsel %vm609, %v602, 0
        %v657 = vsel %vm609, %v603, 0
        %v659 = vsel %vm609, %v604, 0
        %v661 = vsel %vm609, %v605, 0
        %v663 = vsel %vm609, %v606, 0
        %v665 = vsel %vm609, %v607, 0
        %v667 = vsel %vm609, %v608, 0
        %669 = vmatpush.msra.mxu0 0.0
        %670 = vmatpush.msra.mxu0 0.0
        %671 = vmatpush.msra.mxu0 0.0
        %672 = vmatpush.msra.mxu0 0.0
        %673 = vmatpush.msra.mxu0 0.0
        %674 = vmatpush.msra.mxu0 0.0
        %675 = vmatpush.msra.mxu0 0.0
        %676 = vmatpush.msra.mxu0 0.0
        %677 = vmatpush.msra.mxu0 0.0
        %678 = vmatpush.msra.mxu0 0.0
        %679 = vmatpush.msra.mxu0 0.0
        %680 = vmatpush.msra.mxu0 %v653
        %681 = vmatpush.msra.mxu0 %v634
        %682 = vmatpush.msra.mxu0 %v626
        %683 = vmatpush.msra.mxu0 %v618
        %684 = vmatpush.msra.mxu0 %v610
        %685 = vmatmul.f32.gmra.mxu0 %v651
        %v686 = vpop.f32.mrf.mxu0
        %v687 = vadd.f32 %v647, %v686
        %688 = vdwg.mxu0
        %689 = vmatpush.msra.mxu0 0.0
        %690 = vmatpush.msra.mxu0 0.0
        %691 = vmatpush.msra.mxu0 0.0
        %692 = vmatpush.msra.mxu0 0.0
        %693 = vmatpush.msra.mxu0 0.0
        %694 = vmatpush.msra.mxu0 0.0
        %695 = vmatpush.msra.mxu0 0.0
        %696 = vmatpush.msra.mxu0 0.0
        %697 = vmatpush.msra.mxu0 0.0
        %698 = vmatpush.msra.mxu0 0.0
        %699 = vmatpush.msra.mxu0 0.0
        %700 = vmatpush.msra.mxu0 %v655
        %701 = vmatpush.msra.mxu0 %v635
        %702 = vmatpush.msra.mxu0 %v627
        %703 = vmatpush.msra.mxu0 %v619
        %704 = vmatpush.msra.mxu0 %v611
        %705 = vmatmul.f32.gmra.mxu0 %v651
        %v706 = vpop.f32.mrf.mxu0
        %v707 = vadd.f32 %v647, %v706
        %708 = vdwg.mxu0
        %709 = vmatpush.msra.mxu0 0.0
        %710 = vmatpush.msra.mxu0 0.0
        %711 = vmatpush.msra.mxu0 0.0
        %712 = vmatpush.msra.mxu0 0.0
        %713 = vmatpush.msra.mxu0 0.0
        %714 = vmatpush.msra.mxu0 0.0
        %715 = vmatpush.msra.mxu0 0.0
        %716 = vmatpush.msra.mxu0 0.0
        %717 = vmatpush.msra.mxu0 0.0
        %718 = vmatpush.msra.mxu0 0.0
        %719 = vmatpush.msra.mxu0 0.0
        %720 = vmatpush.msra.mxu0 %v657
        %721 = vmatpush.msra.mxu0 %v636
        %722 = vmatpush.msra.mxu0 %v628
        %723 = vmatpush.msra.mxu0 %v620
        %724 = vmatpush.msra.mxu0 %v612
        %725 = vmatmul.f32.gmra.mxu0 %v651
        %v726 = vpop.f32.mrf.mxu0
        %v727 = vadd.f32 %v647, %v726
        %728 = vdwg.mxu0
        %729 = vmatpush.msra.mxu0 0.0
        %730 = vmatpush.msra.mxu0 0.0
        %731 = vmatpush.msra.mxu0 0.0
        %732 = vmatpush.msra.mxu0 0.0
        %733 = vmatpush.msra.mxu0 0.0
        %734 = vmatpush.msra.mxu0 0.0
        %735 = vmatpush.msra.mxu0 0.0
        %736 = vmatpush.msra.mxu0 0.0
        %737 = vmatpush.msra.mxu0 0.0
        %738 = vmatpush.msra.mxu0 0.0
        %739 = vmatpush.msra.mxu0 0.0
        %740 = vmatpush.msra.mxu0 %v659
        %741 = vmatpush.msra.mxu0 %v637
        %742 = vmatpush.msra.mxu0 %v629
        %743 = vmatpush.msra.mxu0 %v621
        %744 = vmatpush.msra.mxu0 %v613
        %745 = vmatmul.f32.gmra.mxu0 %v651
        %v746 = vpop.f32.mrf.mxu0
        %v747 = vadd.f32 %v647, %v746
        %748 = vdwg.mxu0
        %749 = vmatpush.msra.mxu0 0.0
        %750 = vmatpush.msra.mxu0 0.0
        %751 = vmatpush.msra.mxu0 0.0
        %752 = vmatpush.msra.mxu0 0.0
        %753 = vmatpush.msra.mxu0 0.0
        %754 = vmatpush.msra.mxu0 0.0
        %755 = vmatpush.msra.mxu0 0.0
        %756 = vmatpush.msra.mxu0 0.0
        %757 = vmatpush.msra.mxu0 0.0
        %758 = vmatpush.msra.mxu0 0.0
        %759 = vmatpush.msra.mxu0 0.0
        %760 = vmatpush.msra.mxu0 %v661
        %761 = vmatpush.msra.mxu0 %v638
        %762 = vmatpush.msra.mxu0 %v630
        %763 = vmatpush.msra.mxu0 %v622
        %764 = vmatpush.msra.mxu0 %v614
        %765 = vmatmul.f32.gmra.mxu0 %v651
        %v766 = vpop.f32.mrf.mxu0
        %v767 = vadd.f32 %v647, %v766
        %768 = vdwg.mxu0
        %769 = vmatpush.msra.mxu0 0.0
        %770 = vmatpush.msra.mxu0 0.0
        %771 = vmatpush.msra.mxu0 0.0
        %772 = vmatpush.msra.mxu0 0.0
        %773 = vmatpush.msra.mxu0 0.0
        %774 = vmatpush.msra.mxu0 0.0
        %775 = vmatpush.msra.mxu0 0.0
        %776 = vmatpush.msra.mxu0 0.0
        %777 = vmatpush.msra.mxu0 0.0
        %778 = vmatpush.msra.mxu0 0.0
        %779 = vmatpush.msra.mxu0 0.0
        %780 = vmatpush.msra.mxu0 %v663
        %781 = vmatpush.msra.mxu0 %v639
        %782 = vmatpush.msra.mxu0 %v631
        %783 = vmatpush.msra.mxu0 %v623
        %784 = vmatpush.msra.mxu0 %v615
        %785 = vmatmul.f32.gmra.mxu0 %v651
        %v786 = vpop.f32.mrf.mxu0
        %v787 = vadd.f32 %v647, %v786
        %788 = vdwg.mxu0
        %789 = vmatpush.msra.mxu0 0.0
        %790 = vmatpush.msra.mxu0 0.0
        %791 = vmatpush.msra.mxu0 0.0
        %792 = vmatpush.msra.mxu0 0.0
        %793 = vmatpush.msra.mxu0 0.0
        %794 = vmatpush.msra.mxu0 0.0
        %795 = vmatpush.msra.mxu0 0.0
        %796 = vmatpush.msra.mxu0 0.0
        %797 = vmatpush.msra.mxu0 0.0
        %798 = vmatpush.msra.mxu0 0.0
        %799 = vmatpush.msra.mxu0 0.0
        %800 = vmatpush.msra.mxu0 %v665
        %801 = vmatpush.msra.mxu0 %v640
        %802 = vmatpush.msra.mxu0 %v632
        %803 = vmatpush.msra.mxu0 %v624
        %804 = vmatpush.msra.mxu0 %v616
        %805 = vmatmul.f32.gmra.mxu0 %v651
        %v806 = vpop.f32.mrf.mxu0
        %v807 = vadd.f32 %v647, %v806
        %808 = vdwg.mxu0
        %809 = vmatpush.msra.mxu0 0.0
        %810 = vmatpush.msra.mxu0 0.0
        %811 = vmatpush.msra.mxu0 0.0
        %812 = vmatpush.msra.mxu0 0.0
        %813 = vmatpush.msra.mxu0 0.0
        %814 = vmatpush.msra.mxu0 0.0
        %815 = vmatpush.msra.mxu0 0.0
        %816 = vmatpush.msra.mxu0 0.0
        %817 = vmatpush.msra.mxu0 0.0
        %818 = vmatpush.msra.mxu0 0.0
        %819 = vmatpush.msra.mxu0 0.0
        %820 = vmatpush.msra.mxu0 %v667
        %821 = vmatpush.msra.mxu0 %v641
        %822 = vmatpush.msra.mxu0 %v633
        %823 = vmatpush.msra.mxu0 %v625
        %824 = vmatpush.msra.mxu0 %v617
        %825 = vmatmul.f32.gmra.mxu0 %v651
        %v826 = vpop.f32.mrf.mxu0
        %v827 = vadd.f32 %v647, %v826
        %828 = vdwg.mxu0
        %v829 = vrot.slane %v687, 4
        %v830 = vmax.f32 %v687, %v829
        %v831 = vrot.slane %v830, 2
        %v832 = vmax.f32 %v830, %v831
        %v833 = vrot.slane %v832, 1
        %v834 = vmax.f32 %v832, %v833
        %v835 = vrot.slane %v707, 4
        %v836 = vmax.f32 %v707, %v835
        %v837 = vrot.slane %v836, 2
        %v838 = vmax.f32 %v836, %v837
        %v839 = vrot.slane %v838, 1
        %v840 = vmax.f32 %v838, %v839
        %v841 = vrot.slane %v727, 4
        %v842 = vmax.f32 %v727, %v841
        %v843 = vrot.slane %v842, 2
        %v844 = vmax.f32 %v842, %v843
        %v845 = vrot.slane %v844, 1
        %v846 = vmax.f32 %v844, %v845
        %v847 = vrot.slane %v747, 4
        %v848 = vmax.f32 %v747, %v847
        %v849 = vrot.slane %v848, 2
        %v850 = vmax.f32 %v848, %v849
        %v851 = vrot.slane %v850, 1
        %v852 = vmax.f32 %v850, %v851
        %v853 = vrot.slane %v767, 4
        %v854 = vmax.f32 %v767, %v853
        %v855 = vrot.slane %v854, 2
        %v856 = vmax.f32 %v854, %v855
        %v857 = vrot.slane %v856, 1
        %v858 = vmax.f32 %v856, %v857
        %v859 = vrot.slane %v787, 4
        %v860 = vmax.f32 %v787, %v859
        %v861 = vrot.slane %v860, 2
        %v862 = vmax.f32 %v860, %v861
        %v863 = vrot.slane %v862, 1
        %v864 = vmax.f32 %v862, %v863
        %v865 = vrot.slane %v807, 4
        %v866 = vmax.f32 %v807, %v865
        %v867 = vrot.slane %v866, 2
        %v868 = vmax.f32 %v866, %v867
        %v869 = vrot.slane %v868, 1
        %v870 = vmax.f32 %v868, %v869
        %v871 = vrot.slane %v827, 4
        %v872 = vmax.f32 %v827, %v871
        %v873 = vrot.slane %v872, 2
        %v874 = vmax.f32 %v872, %v873
        %v875 = vrot.slane %v874, 1
        %v876 = vmax.f32 %v874, %v875
        %v877 = vmax.f32 %v834, 0.0
        %v878 = vmax.f32 %v840, 0.0
        %v879 = vmax.f32 %v846, 0.0
        %v880 = vmax.f32 %v852, 0.0
        %v881 = vmax.f32 %v858, 0.0
        %v882 = vmax.f32 %v864, 0.0
        %v883 = vmax.f32 %v870, 0.0
        %v884 = vmax.f32 %v876, 0.0
        %vm885 = vcmask 1040384
        %v886 = vsel %vm885, %v877, %v878
        %vm887 = vcmask 1041408
        %v888 = vsel %vm887, %v886, %v879
        %vm889 = vcmask 1042432
        %v890 = vsel %vm889, %v888, %v880
        %v891 = vsel %vm609, %v890, %v881
        %vm892 = vcmask 1044480
        %v893 = vsel %vm892, %v891, %v882
        %vm894 = vcmask 1045504
        %v895 = vsel %vm894, %v893, %v883
        %vm896 = vcmask 1046528
        %v897 = vsel %vm896, %v895, %v884
        %v898 = vlaneseq
        %v899 = vand.u32 %v898, 127
        %vm900 = vcmask 130048
        %v901 = vsel %vm900, %v897, -inf
        %902 = vmax.xlane.f32.xlu0 %v901
        %v903 = vpop.xlane.xlu0 %902
        %vm904 = vcmp.eq.f32.partialorder %v897, %v903
        %v905 = vsel %vm904, %v899, 16
        %v906 = vsel %vm900, %v905, 2147483647
        %v907 = vand.u32 %v906, 65535
        %v908 = vshra.s32 %v906, 16
        %v909 = vcvt.s32.f32 %v907
        %v910 = vcvt.s32.f32 %v908
        %911 = vmin.xlane.f32.xlu0 %v910
        %v912 = vpop.xlane.xlu0 %911
        %vm913 = vcmp.eq.f32.partialorder %v910, %v912
        %v914 = vsel %vm913, %v909, inf
        %915 = vmin.xlane.f32.xlu0 %v914
        %v916 = vpop.xlane.xlu0 %915
        %v917 = vcvt.f32.s32 %v916
        %v918 = vcvt.f32.s32 %v912
        %v919 = vshll.u32 %v918, 16
        %v920 = vadd.s32 %v919, %v917
        %vm921 = vcmp.eq.s32.totalorder %v899, %v920
        %v922 = vsel %vm921, -1.0, %v897
        %v923 = vsel %vm900, %v922, -inf
        %924 = vmax.xlane.f32.xlu0 %v923
        %v925 = vpop.xlane.xlu0 %924
        %vm926 = vcmp.eq.f32.partialorder %v922, %v925
        %v927 = vsel %vm926, %v899, 16
        %v928 = vsel %vm900, %v927, 2147483647
        %v929 = vand.u32 %v928, 65535
        %v930 = vshra.s32 %v928, 16
        %v931 = vcvt.s32.f32 %v929
        %v932 = vcvt.s32.f32 %v930
        %933 = vmin.xlane.f32.xlu0 %v932
        %v934 = vpop.xlane.xlu0 %933
        %vm935 = vcmp.eq.f32.partialorder %v932, %v934
        %v936 = vsel %vm935, %v931, inf
        %937 = vmin.xlane.f32.xlu0 %v936
        %v938 = vpop.xlane.xlu0 %937
        %v939 = vcvt.f32.s32 %v938
        %v940 = vcvt.f32.s32 %v934
        %v941 = vshll.u32 %v940, 16
        %v942 = vadd.s32 %v941, %v939
        %vm943 = vcmp.eq.s32.totalorder %v899, %v942
        %v944 = vsel %vm943, -1.0, %v922
        %v945 = vsel %vm900, %v944, -inf
        %946 = vmax.xlane.f32.xlu0 %v945
        %v947 = vpop.xlane.xlu0 %946
        %vm948 = vcmp.eq.f32.partialorder %v944, %v947
        %v949 = vsel %vm948, %v899, 16
        %v950 = vsel %vm900, %v949, 2147483647
        %v951 = vand.u32 %v950, 65535
        %v952 = vshra.s32 %v950, 16
        %v953 = vcvt.s32.f32 %v951
        %v954 = vcvt.s32.f32 %v952
        %955 = vmin.xlane.f32.xlu0 %v954
        %v956 = vpop.xlane.xlu0 %955
        %vm957 = vcmp.eq.f32.partialorder %v954, %v956
        %v958 = vsel %vm957, %v953, inf
        %959 = vmin.xlane.f32.xlu0 %v958
        %v960 = vpop.xlane.xlu0 %959
        %v961 = vcvt.f32.s32 %v960
        %v962 = vcvt.f32.s32 %v956
        %v963 = vshll.u32 %v962, 16
        %v964 = vadd.s32 %v963, %v961
        %vm965 = vcmp.eq.s32.totalorder %v899, %v964
        %v966 = vsel %vm965, -1.0, %v944
        %v967 = vsel %vm900, %v966, -inf
        %968 = vmax.xlane.f32.xlu0 %v967
        %v969 = vpop.xlane.xlu0 %968
        %vm970 = vcmask 7168
        %v971 = vsel %vm970, %v903, %v925
        %vm972 = vcmask 15360
        %v973 = vsel %vm972, %v971, %v947
        %vm974 = vcmask 23552
        %v975 = vsel %vm974, %v973, %v969
        %vm976 = vcmask 31744
        %v977 = vsel %vm976, %v975, 0.0
        %978 = vst [vmem:[%s188] sm:$0xff] %v977
        %s979 = sand.u32 %s96, 1
        %s980 = scalar_lea.sflag [#allocation4], %s979
        %s981 = sand.u32 %s96, 1
        %s982 = smul.addr %s981, 8
        %s983 = scalar_lea.vmem [#allocation5], %s982
        // Predicated region
        $region37: #{tpu_custom_call.1} parent=31 // pred_check
          %p984 = pneg %p106
        $region38: #{tpu_custom_call.1} parent=31 // pred_check_branch
          %986 = sbr.rel (%p984) target = $region40
        $region39: #{tpu_custom_call.1} parent=31 // pred_region
          %988 = vsyncadd %s980, 0
          %s989 = smul.addr %s20, 8
          %s990 = scalar_lea.hbm %s3, %s989
          %s992 = sshll.u32 %s983, 4
          %s993 = int_to_ptr.vmem [resolvable:$true] %s992
          %s994 = sshll.u32 %s990, 4
          %s995 = int_to_ptr.hbm [resolvable:$true] %s994
          %997 = dma.vmem_to_hbm [thread:$0]  %s993, 128, %s995, %s980
        $region40: #{tpu_custom_call.1} parent=31 // pred_fallthru
          _
      $region32: #{tpu_custom_call.1} parent=5 // pred_fallthru
        _
      %p998 = scmp.le.s32.totalorder 2, %s15
      // Predicated region
      $region41: #{tpu_custom_call.1} parent=5 // pred_check
        %p999 = pneg %p998
      $region42: #{tpu_custom_call.1} parent=5 // pred_check_branch
        %1001 = sbr.rel (%p999) target = $region44
      $region43: #{tpu_custom_call.1} parent=5 // pred_region
        %s1002 = ssub.s32 %s15, 2
        // Predicated region
        $region45: #{tpu_custom_call.1} parent=43 // pred_check
          %p1003 = pneg %p112
        $region46: #{tpu_custom_call.1} parent=43 // pred_check_branch
          %1005 = sbr.rel (%p1003) target = $region48
        $region47: #{tpu_custom_call.1} parent=43 // pred_region
          %s1006 = sand.u32 %s97, 1
          %s1007 = scalar_lea.sflag [#allocation4], %s1006
          %s1008 = sand.u32 %s97, 1
          %s1009 = smul.addr %s1008, 8
          %s1010 = scalar_lea.vmem [#allocation5], %s1009
          %1012 = dma.done %s1007, 128
        $region48: #{tpu_custom_call.1} parent=43 // pred_fallthru
          _
      $region44: #{tpu_custom_call.1} parent=5 // pred_fallthru
        _
    $region6: #{tpu_custom_call.1} parent=1 // loop_footer
      %s19 = sadd.s32 1, %s15
    $region7: #{tpu_custom_call.1} parent=1 // loop_footer_branch
      %14 = sbr.rel target = $region3
    $region8: #{tpu_custom_call.1} parent=1 // loop_exit
      _
    %1013 = vsyncpa [#allocation3], 1
    %s1014 = scalar_lea.sflag [#allocation3], 1
    %1015 = vsyncpa %s1014, 1
    %1016 = vsyncpa [#allocation4], 1
    %s1017 = scalar_lea.sflag [#allocation4], 1
    %1018 = vsyncpa %s1017, 1

</llo_original>
